<compile_context>
chip_gen: v6e
topology: v6e:2x2x1
jax: 0.10.0
libtpu: 0.0.40
codegen_flags: <defaults>
</compile_context>

<pallas_src>
import jax
import jax.numpy as jnp
from jax import lax
from jax.experimental import pallas as pl
from jax.experimental.pallas import tpu as pltpu


def gat_gpt_fused_kernel(x_ref, xt_ref, waug_ref, msrct_ref, mask_ref, fcp_ref, out_ref):
    """Fused single-layer GAT_GPT forward (GATConv + BatchNorm + ELU + fc).

    x_ref     : [N, Din]      node features
    xt_ref    : [Din, N]      same features, pre-transposed (layout plumbing only)
    waug_ref  : [Din, F+H]    [ W | W @ att_dst_blockdiag ]  (F = heads * dim_hidden)
    msrct_ref : [H, Din]      (W @ att_src_blockdiag)^T
    mask_ref  : [N, N] int8   1 on edges (dst, src) incl. self loops, 0 elsewhere
    fcp_ref   : [8+F, 128]    row0=conv bias, row1=BN gamma, row2=BN beta,
                              row3=fc bias (lane-padded), rows 8:8+F = fc weight^T (lane-padded)
    out_ref   : [N, 128]      lane-dense padded output (real dim_out sliced outside)
    """
    f32 = jnp.float32
    N = x_ref.shape[0]
    H = msrct_ref.shape[0]
    F = waug_ref.shape[1] - H
    C = F // H
    HN = H * N

    # ---- fused GATConv linear: values h AND per-head dst logits in ONE MXU call ----
    h_aug = jnp.dot(x_ref[...], waug_ref[...], preferred_element_type=f32)   # [N, F+H]
    h = h_aug[:, :F]                                                         # [N, F]
    a_dst = h_aug[:, F:F + H]                                                # [N, H]

    # per-head src logits with the SRC-node index on the lane axis
    a_src_t = jnp.dot(msrct_ref[...], xt_ref[...], preferred_element_type=f32)  # [H, N]

    # block-structure indicator matrices built on the VPU (no extra DMAs, no int div)
    lane = lax.broadcasted_iota(jnp.int32, (H, HN), 1)
    row = lax.broadcasted_iota(jnp.int32, (H, HN), 0)
    r_blk = ((lane >= row * N) & (lane < row * N + N)).astype(f32)           # [H, HN]
    rowl = lax.broadcasted_iota(jnp.int32, (HN, H), 0)
    colh = lax.broadcasted_iota(jnp.int32, (HN, H), 1)
    rt_blk = ((rowl >= colh * N) & (rowl < colh * N + N)).astype(f32)        # [HN, H]

    # ---- attention logits in the concatenated lane-dense layout e[i, h*N + j] ----
    s_row = jnp.sum(jnp.concatenate([a_src_t] * H, axis=1) * r_blk,
                    axis=0, keepdims=True)                                   # [1, HN]
    # single [N, HN] temporary, updated in place through the chain below
    e = jnp.dot(a_dst, r_blk, preferred_element_type=f32) + s_row            # [N, HN]
    e = jnp.maximum(e, 0.2 * e)                                              # LeakyReLU(0.2)
    edge = jnp.concatenate([mask_ref[...].astype(f32)] * H, axis=1) > 0.0    # [N, HN]
    e = jnp.where(edge, e, -1e30)

    # ---- per-head masked softmax over src nodes ----
    # The per-dst-row max is a single constant across every head block of that row,
    # so subtracting it leaves each head's softmax unchanged while preventing overflow.
    e = e - jnp.max(e, axis=-1, keepdims=True)
    e = jnp.exp(e)                                                           # probs (unnorm)
    den = jnp.dot(e, rt_blk, preferred_element_type=f32)                     # [N, H]
    inv = pl.reciprocal(den + 1e-30, approx=True)                            # EUP slot
    e = e * jnp.dot(inv, r_blk, preferred_element_type=f32)                  # normalized p
    # TODO(synk): GATConv attention dropout omitted (eval-mode identity).

    # ---- aggregation: block-diagonal values -> ONE lane-dense [N, F] MXU output ----
    colf = lax.broadcasted_iota(jnp.int32, (N, F), 1)
    v_blocks = []
    for hh in range(H):                       # static loop: full-width [N, F] selects
        sel = (colf >= hh * C) & (colf < (hh + 1) * C)
        v_blocks.append(jnp.where(sel, h, 0.0))
    v_bd = jnp.concatenate(v_blocks, axis=0)                                 # [HN, F]
    z = jnp.dot(e, v_bd, preferred_element_type=f32)                         # [N, F]

    # GATConv bias (mathematically cancelled by the batch-stat BN below; kept for fidelity)
    z = z + fcp_ref[0:1, :F]

    # ---- BatchNorm1d (training-mode batch stats, eps=1e-5), two-pass centered variance ----
    mean = jnp.mean(z, axis=0, keepdims=True)
    zc = z - mean
    var = jnp.mean(zc * zc, axis=0, keepdims=True)
    y = fcp_ref[1:2, :F] * zc * lax.rsqrt(var + 1e-5) + fcp_ref[2:3, :F]

    # ---- ELU(alpha=1) ----
    # TODO(synk): on v6e/v7x this exp (and the softmax exp) could run in bf16.
    y = jnp.where(y > 0, y, jnp.exp(jnp.minimum(y, 0.0)) - 1.0)

    # per-node attention = softmax(Linear(y), dim=1) over a width-1 axis is identically
    # 1.0 -> bit-exact identity, removed (its weights are never loaded).

    # ---- fused final fc into a lane-dense padded output (sliced in the wrapper) ----
    out_ref[...] = (jnp.dot(y, fcp_ref[8:8 + F, :], preferred_element_type=f32)
                    + fcp_ref[3:4, :])


_VMEM = pl.BlockSpec(memory_space=pltpu.MemorySpace.VMEM)


def gat_gpt_forward(x, w, att_src, att_dst, conv_bias, gamma, beta, w_fc, b_fc, edge_mask):
    """edge_mask: [N, N] int8 in [dst, src] orientation with self loops included."""
    N, d_in = x.shape
    H, C = att_src.shape
    F = H * C
    d_out = w_fc.shape[0]
    DP = 128                      # lane-dense padded output / fc width

    f32 = jnp.float32
    eye_h = jnp.eye(H, dtype=f32)
    # block-diagonal attention-coefficient matrices [F, H]
    a_src_bd = (att_src.astype(f32)[:, :, None] * eye_h[:, None, :]).reshape(F, H)
    a_dst_bd = (att_dst.astype(f32)[:, :, None] * eye_h[:, None, :]).reshape(F, H)

    # fold the per-head attention coefficients into the input linear
    w_aug = jnp.concatenate([w, w @ a_dst_bd], axis=1)        # [Din, F+H]
    m_src_t = (w @ a_src_bd).T                                # [H, Din]

    # pack every small per-feature parameter into ONE lane-dense (8+F, 128) array
    fcp = jnp.zeros((8 + F, DP), f32)
    fcp = fcp.at[0, :F].set(conv_bias.reshape(F))
    fcp = fcp.at[1, :F].set(gamma.reshape(F))
    fcp = fcp.at[2, :F].set(beta.reshape(F))
    fcp = fcp.at[3, :d_out].set(b_fc.reshape(d_out))
    fcp = fcp.at[8:8 + F, :d_out].set(w_fc.T)

    # explicit VMEM budget sized from the actual working set (x2 headroom)
    hn = H * N
    work_bytes = 4 * (3 * N * hn + 2 * hn * F + 2 * N * N + 6 * N * F
                      + (8 + F) * DP + N * DP + 2 * N * d_in + d_in * (F + H))
    vmem_limit = int(min(100 * 2 ** 20, max(4 * 2 ** 20, 2 * work_bytes)))

    out_pad = pl.pallas_call(
        gat_gpt_fused_kernel,
        out_shape=jax.ShapeDtypeStruct((N, DP), f32),
        in_specs=[_VMEM] * 6,
        out_specs=_VMEM,
        compiler_params=pltpu.CompilerParams(vmem_limit_bytes=vmem_limit),
    )(x, x.T, w_aug, m_src_t, edge_mask, fcp)
    return out_pad[:, :d_out]


if __name__ == "__main__":
    key = jax.random.PRNGKey(0)
    num_layers = 1      # forward only type-checks for num_layers == 1 (see header)
    heads, dim_in, dim_hidden, dim_out = 4, 8, 8, 4
    N = 16              # number of graph nodes
    F = heads * dim_hidden

    keys = jax.random.split(key, 10)

    # graph: raw_A nonzero entries (i, j) are edges i -> j (PyG: src=i, dst=j)
    raw_A = (jax.random.uniform(keys[0], (N, N)) < 0.3).astype(jnp.float32)
    raw_A = raw_A * (1.0 - jnp.eye(N, dtype=jnp.float32))
    # [dst, src] adjacency + GATConv self loops, stored as int8 (applied with where in-kernel)
    edge_mask = ((raw_A.T + jnp.eye(N, dtype=jnp.float32)) > 0).astype(jnp.int8)

    x = jax.random.normal(keys[1], (N, dim_in), jnp.float32)

    # GATConv parameters (layer 0)
    w = 0.2 * jax.random.normal(keys[2], (dim_in, F), jnp.float32)
    att_src = 0.2 * jax.random.normal(keys[3], (heads, dim_hidden), jnp.float32)
    att_dst = 0.2 * jax.random.normal(keys[4], (heads, dim_hidden), jnp.float32)
    conv_bias = 0.1 * jax.random.normal(keys[5], (F,), jnp.float32)

    # BatchNorm1d affine params
    gamma = 1.0 + 0.1 * jax.random.normal(keys[6], (F,), jnp.float32)
    beta = 0.1 * jax.random.normal(keys[7], (F,), jnp.float32)

    # per-layer attention Linear(F, 1): softmax over its width-1 output is identically
    # 1.0, so its parameters never affect the output (not created).

    # final fc: Linear(num_layers * heads * dim_hidden, dim_out)
    w_fc = 0.2 * jax.random.normal(keys[8], (dim_out, num_layers * F), jnp.float32)
    b_fc = 0.1 * jax.random.normal(keys[9], (dim_out,), jnp.float32)

    out = gat_gpt_forward(x, w, att_src, att_dst, conv_bias, gamma, beta,
                          w_fc, b_fc, edge_mask)
    jax.block_until_ready(out)
    assert out.shape == (N, dim_out)
    print("KERNEL_OK")
</pallas_src>

<mosaic_0001>
module attributes {stable_mosaic.version = 11 : i64} {
  func.func @gat_gpt_fused_kernel(%arg0: memref<16x8xf32, #tpu.memory_space<vmem>>, %arg1: memref<8x16xf32, #tpu.memory_space<vmem>>, %arg2: memref<8x36xf32, #tpu.memory_space<vmem>>, %arg3: memref<4x8xf32, #tpu.memory_space<vmem>>, %arg4: memref<16x16xi8, #tpu.memory_space<vmem>>, %arg5: memref<40x128xf32, #tpu.memory_space<vmem>>, %arg6: memref<16x128xf32, #tpu.memory_space<vmem>>) attributes {dimension_semantics = [], scalar_prefetch = 0 : i64, scratch_operands = 0 : i64, tpu.core_type = #tpu.core_type<tc>} {
    %c0 = arith.constant 0 : index
    %c0_0 = arith.constant 0 : index
    %0 = vector.load %arg0[%c0, %c0_0] : memref<16x8xf32, #tpu.memory_space<vmem>>, vector<16x8xf32>
    %c0_1 = arith.constant 0 : index
    %c0_2 = arith.constant 0 : index
    %1 = vector.load %arg2[%c0_1, %c0_2] : memref<8x36xf32, #tpu.memory_space<vmem>>, vector<8x36xf32>
    %cst = arith.constant dense<0.000000e+00> : vector<16x36xf32>
    %2 = tpu.matmul %0, %1, %cst {dimension_numbers = #tpu.dot_dimension_numbers<[1], [0], [0], [1], [0, 0, 1, 1], [], []>} : vector<16x8xf32>, vector<8x36xf32>, vector<16x36xf32> -> vector<16x36xf32>
    %3 = vector.extract_strided_slice %2 {offsets = [0, 0], sizes = [16, 32], strides = [1, 1]} : vector<16x36xf32> to vector<16x32xf32>
    %4 = vector.extract_strided_slice %2 {offsets = [0, 32], sizes = [16, 4], strides = [1, 1]} : vector<16x36xf32> to vector<16x4xf32>
    %c0_3 = arith.constant 0 : index
    %c0_4 = arith.constant 0 : index
    %5 = vector.load %arg3[%c0_3, %c0_4] : memref<4x8xf32, #tpu.memory_space<vmem>>, vector<4x8xf32>
    %c0_5 = arith.constant 0 : index
    %c0_6 = arith.constant 0 : index
    %6 = vector.load %arg1[%c0_5, %c0_6] : memref<8x16xf32, #tpu.memory_space<vmem>>, vector<8x16xf32>
    %cst_7 = arith.constant dense<0.000000e+00> : vector<4x16xf32>
    %7 = tpu.matmul %5, %6, %cst_7 {dimension_numbers = #tpu.dot_dimension_numbers<[1], [0], [0], [1], [0, 0, 1, 1], [], []>} : vector<4x8xf32>, vector<8x16xf32>, vector<4x16xf32> -> vector<4x16xf32>
    %8 = tpu.iota {dimensions = array<i32: 1>} : vector<4x64xi32>
    %9 = tpu.iota {dimensions = array<i32: 0>} : vector<4x64xi32>
    %c16_i32 = arith.constant 16 : i32
    %10 = vector.broadcast %c16_i32 : i32 to vector<4x64xi32>
    %11 = arith.muli %9, %10 : vector<4x64xi32>
    %12 = arith.cmpi sge, %8, %11 : vector<4x64xi32>
    %c16_i32_8 = arith.constant 16 : i32
    %13 = vector.broadcast %c16_i32_8 : i32 to vector<4x64xi32>
    %14 = arith.muli %9, %13 : vector<4x64xi32>
    %c16_i32_9 = arith.constant 16 : i32
    %15 = vector.broadcast %c16_i32_9 : i32 to vector<4x64xi32>
    %16 = arith.addi %14, %15 : vector<4x64xi32>
    %17 = arith.cmpi slt, %8, %16 : vector<4x64xi32>
    %18 = arith.andi %12, %17 : vector<4x64xi1>
    %19 = arith.extui %18 : vector<4x64xi1> to vector<4x64xi32>
    %20 = arith.sitofp %19 : vector<4x64xi32> to vector<4x64xf32>
    %21 = tpu.iota {dimensions = array<i32: 0>} : vector<64x4xi32>
    %22 = tpu.iota {dimensions = array<i32: 1>} : vector<64x4xi32>
    %c16_i32_10 = arith.constant 16 : i32
    %23 = vector.broadcast %c16_i32_10 : i32 to vector<64x4xi32>
    %24 = arith.muli %22, %23 : vector<64x4xi32>
    %25 = arith.cmpi sge, %21, %24 : vector<64x4xi32>
    %c16_i32_11 = arith.constant 16 : i32
    %26 = vector.broadcast %c16_i32_11 : i32 to vector<64x4xi32>
    %27 = arith.muli %22, %26 : vector<64x4xi32>
    %c16_i32_12 = arith.constant 16 : i32
    %28 = vector.broadcast %c16_i32_12 : i32 to vector<64x4xi32>
    %29 = arith.addi %27, %28 : vector<64x4xi32>
    %30 = arith.cmpi slt, %21, %29 : vector<64x4xi32>
    %31 = arith.andi %25, %30 : vector<64x4xi1>
    %32 = arith.extui %31 : vector<64x4xi1> to vector<64x4xi32>
    %33 = arith.sitofp %32 : vector<64x4xi32> to vector<64x4xf32>
    %34 = tpu.concatenate %7, %7, %7, %7 in 1 : vector<4x16xf32>, vector<4x16xf32>, vector<4x16xf32>, vector<4x16xf32> -> vector<4x64xf32>
    %35 = arith.mulf %34, %20 : vector<4x64xf32>
    %cst_13 = arith.constant dense<0.000000e+00> : vector<64xf32>
    %36 = vector.multi_reduction <add>, %35, %cst_13 [0] : vector<4x64xf32> to vector<64xf32>
    %37 = vector.shape_cast %36 : vector<64xf32> to vector<1x64xf32>
    %cst_14 = arith.constant dense<0.000000e+00> : vector<16x64xf32>
    %38 = tpu.matmul %4, %20, %cst_14 {dimension_numbers = #tpu.dot_dimension_numbers<[1], [0], [0], [1], [0, 0, 1, 1], [], []>} : vector<16x4xf32>, vector<4x64xf32>, vector<16x64xf32> -> vector<16x64xf32>
    %39 = vector.broadcast %37 : vector<1x64xf32> to vector<16x64xf32>
    %40 = arith.addf %38, %39 : vector<16x64xf32>
    %cst_15 = arith.constant 2.000000e-01 : f32
    %41 = vector.broadcast %cst_15 : f32 to vector<16x64xf32>
    %42 = arith.mulf %41, %40 : vector<16x64xf32>
    %43 = arith.maximumf %40, %42 : vector<16x64xf32>
    %c0_16 = arith.constant 0 : index
    %c0_17 = arith.constant 0 : index
    %44 = vector.load %arg4[%c0_16, %c0_17] : memref<16x16xi8, #tpu.memory_space<vmem>>, vector<16x16xi8>
    %45 = arith.sitofp %44 : vector<16x16xi8> to vector<16x16xf32>
    %46 = tpu.concatenate %45, %45, %45, %45 in 1 : vector<16x16xf32>, vector<16x16xf32>, vector<16x16xf32>, vector<16x16xf32> -> vector<16x64xf32>
    %cst_18 = arith.constant 0.000000e+00 : f32
    %47 = vector.broadcast %cst_18 : f32 to vector<16x64xf32>
    %48 = arith.cmpf ogt, %46, %47 : vector<16x64xf32>
    %cst_19 = arith.constant -1.000000e+30 : f32
    %49 = vector.broadcast %cst_19 : f32 to vector<16x64xf32>
    %50 = arith.select %48, %43, %49 : vector<16x64xi1>, vector<16x64xf32>
    %cst_20 = arith.constant dense<0xFF800000> : vector<16xf32>
    %51 = vector.multi_reduction <maximumf>, %50, %cst_20 [1] : vector<16x64xf32> to vector<16xf32>
    %52 = vector.shape_cast %51 : vector<16xf32> to vector<16x1xf32>
    %53 = vector.broadcast %52 : vector<16x1xf32> to vector<16x64xf32>
    %54 = arith.subf %50, %53 : vector<16x64xf32>
    %55 = math.exp %54 : vector<16x64xf32>
    %cst_21 = arith.constant dense<0.000000e+00> : vector<16x4xf32>
    %56 = tpu.matmul %55, %33, %cst_21 {dimension_numbers = #tpu.dot_dimension_numbers<[1], [0], [0], [1], [0, 0, 1, 1], [], []>} : vector<16x64xf32>, vector<64x4xf32>, vector<16x4xf32> -> vector<16x4xf32>
    %cst_22 = arith.constant 1.000000e-30 : f32
    %57 = vector.broadcast %cst_22 : f32 to vector<16x4xf32>
    %58 = arith.addf %56, %57 : vector<16x4xf32>
    %59 = tpu.reciprocal %58 {approx = true} : vector<16x4xf32> -> vector<16x4xf32>
    %cst_23 = arith.constant dense<0.000000e+00> : vector<16x64xf32>
    %60 = tpu.matmul %59, %20, %cst_23 {dimension_numbers = #tpu.dot_dimension_numbers<[1], [0], [0], [1], [0, 0, 1, 1], [], []>} : vector<16x4xf32>, vector<4x64xf32>, vector<16x64xf32> -> vector<16x64xf32>
    %61 = arith.mulf %55, %60 : vector<16x64xf32>
    %62 = tpu.iota {dimensions = array<i32: 1>} : vector<16x32xi32>
    %c0_i32 = arith.constant 0 : i32
    %63 = vector.broadcast %c0_i32 : i32 to vector<16x32xi32>
    %64 = arith.cmpi sge, %62, %63 : vector<16x32xi32>
    %c8_i32 = arith.constant 8 : i32
    %65 = vector.broadcast %c8_i32 : i32 to vector<16x32xi32>
    %66 = arith.cmpi slt, %62, %65 : vector<16x32xi32>
    %67 = arith.andi %64, %66 : vector<16x32xi1>
    %cst_24 = arith.constant 0.000000e+00 : f32
    %68 = vector.broadcast %cst_24 : f32 to vector<16x32xf32>
    %69 = arith.select %67, %3, %68 : vector<16x32xi1>, vector<16x32xf32>
    %c8_i32_25 = arith.constant 8 : i32
    %70 = vector.broadcast %c8_i32_25 : i32 to vector<16x32xi32>
    %71 = arith.cmpi sge, %62, %70 : vector<16x32xi32>
    %c16_i32_26 = arith.constant 16 : i32
    %72 = vector.broadcast %c16_i32_26 : i32 to vector<16x32xi32>
    %73 = arith.cmpi slt, %62, %72 : vector<16x32xi32>
    %74 = arith.andi %71, %73 : vector<16x32xi1>
    %cst_27 = arith.constant 0.000000e+00 : f32
    %75 = vector.broadcast %cst_27 : f32 to vector<16x32xf32>
    %76 = arith.select %74, %3, %75 : vector<16x32xi1>, vector<16x32xf32>
    %c16_i32_28 = arith.constant 16 : i32
    %77 = vector.broadcast %c16_i32_28 : i32 to vector<16x32xi32>
    %78 = arith.cmpi sge, %62, %77 : vector<16x32xi32>
    %c24_i32 = arith.constant 24 : i32
    %79 = vector.broadcast %c24_i32 : i32 to vector<16x32xi32>
    %80 = arith.cmpi slt, %62, %79 : vector<16x32xi32>
    %81 = arith.andi %78, %80 : vector<16x32xi1>
    %cst_29 = arith.constant 0.000000e+00 : f32
    %82 = vector.broadcast %cst_29 : f32 to vector<16x32xf32>
    %83 = arith.select %81, %3, %82 : vector<16x32xi1>, vector<16x32xf32>
    %c24_i32_30 = arith.constant 24 : i32
    %84 = vector.broadcast %c24_i32_30 : i32 to vector<16x32xi32>
    %85 = arith.cmpi sge, %62, %84 : vector<16x32xi32>
    %c32_i32 = arith.constant 32 : i32
    %86 = vector.broadcast %c32_i32 : i32 to vector<16x32xi32>
    %87 = arith.cmpi slt, %62, %86 : vector<16x32xi32>
    %88 = arith.andi %85, %87 : vector<16x32xi1>
    %cst_31 = arith.constant 0.000000e+00 : f32
    %89 = vector.broadcast %cst_31 : f32 to vector<16x32xf32>
    %90 = arith.select %88, %3, %89 : vector<16x32xi1>, vector<16x32xf32>
    %91 = tpu.concatenate %69, %76, %83, %90 in 0 : vector<16x32xf32>, vector<16x32xf32>, vector<16x32xf32>, vector<16x32xf32> -> vector<64x32xf32>
    %cst_32 = arith.constant dense<0.000000e+00> : vector<16x32xf32>
    %92 = tpu.matmul %61, %91, %cst_32 {dimension_numbers = #tpu.dot_dimension_numbers<[1], [0], [0], [1], [0, 0, 1, 1], [], []>} : vector<16x64xf32>, vector<64x32xf32>, vector<16x32xf32> -> vector<16x32xf32>
    %c0_33 = arith.constant 0 : index
    %c0_34 = arith.constant 0 : index
    %93 = vector.load %arg5[%c0_33, %c0_34] : memref<40x128xf32, #tpu.memory_space<vmem>>, vector<1x32xf32>
    %94 = vector.broadcast %93 : vector<1x32xf32> to vector<16x32xf32>
    %95 = arith.addf %92, %94 : vector<16x32xf32>
    %cst_35 = arith.constant dense<0.000000e+00> : vector<32xf32>
    %96 = vector.multi_reduction <add>, %95, %cst_35 [0] : vector<16x32xf32> to vector<32xf32>
    %97 = vector.shape_cast %96 : vector<32xf32> to vector<1x32xf32>
    %cst_36 = arith.constant 1.600000e+01 : f32
    %98 = vector.broadcast %cst_36 : f32 to vector<1x32xf32>
    %99 = arith.divf %97, %98 : vector<1x32xf32>
    %100 = vector.broadcast %99 : vector<1x32xf32> to vector<16x32xf32>
    %101 = arith.subf %95, %100 : vector<16x32xf32>
    %102 = arith.mulf %101, %101 : vector<16x32xf32>
    %cst_37 = arith.constant dense<0.000000e+00> : vector<32xf32>
    %103 = vector.multi_reduction <add>, %102, %cst_37 [0] : vector<16x32xf32> to vector<32xf32>
    %104 = vector.shape_cast %103 : vector<32xf32> to vector<1x32xf32>
    %cst_38 = arith.constant 1.600000e+01 : f32
    %105 = vector.broadcast %cst_38 : f32 to vector<1x32xf32>
    %106 = arith.divf %104, %105 : vector<1x32xf32>
    %c1 = arith.constant 1 : index
    %c0_39 = arith.constant 0 : index
    %107 = vector.load %arg5[%c1, %c0_39] : memref<40x128xf32, #tpu.memory_space<vmem>>, vector<1x32xf32>
    %108 = vector.broadcast %107 : vector<1x32xf32> to vector<16x32xf32>
    %109 = arith.mulf %108, %101 : vector<16x32xf32>
    %cst_40 = arith.constant 9.99999974E-6 : f32
    %110 = vector.broadcast %cst_40 : f32 to vector<1x32xf32>
    %111 = arith.addf %106, %110 : vector<1x32xf32>
    %112 = math.rsqrt %111 : vector<1x32xf32>
    %113 = vector.broadcast %112 : vector<1x32xf32> to vector<16x32xf32>
    %114 = arith.mulf %109, %113 : vector<16x32xf32>
    %c2 = arith.constant 2 : index
    %c0_41 = arith.constant 0 : index
    %115 = vector.load %arg5[%c2, %c0_41] : memref<40x128xf32, #tpu.memory_space<vmem>>, vector<1x32xf32>
    %116 = vector.broadcast %115 : vector<1x32xf32> to vector<16x32xf32>
    %117 = arith.addf %114, %116 : vector<16x32xf32>
    %cst_42 = arith.constant 0.000000e+00 : f32
    %118 = vector.broadcast %cst_42 : f32 to vector<16x32xf32>
    %119 = arith.cmpf ogt, %117, %118 : vector<16x32xf32>
    %cst_43 = arith.constant 0.000000e+00 : f32
    %120 = vector.broadcast %cst_43 : f32 to vector<16x32xf32>
    %121 = arith.minimumf %117, %120 : vector<16x32xf32>
    %122 = math.exp %121 : vector<16x32xf32>
    %cst_44 = arith.constant 1.000000e+00 : f32
    %123 = vector.broadcast %cst_44 : f32 to vector<16x32xf32>
    %124 = arith.subf %122, %123 : vector<16x32xf32>
    %125 = arith.select %119, %117, %124 : vector<16x32xi1>, vector<16x32xf32>
    %c8 = arith.constant 8 : index
    %c0_45 = arith.constant 0 : index
    %126 = vector.load %arg5[%c8, %c0_45] : memref<40x128xf32, #tpu.memory_space<vmem>>, vector<32x128xf32>
    %cst_46 = arith.constant dense<0.000000e+00> : vector<16x128xf32>
    %127 = tpu.matmul %125, %126, %cst_46 {dimension_numbers = #tpu.dot_dimension_numbers<[1], [0], [0], [1], [0, 0, 1, 1], [], []>} : vector<16x32xf32>, vector<32x128xf32>, vector<16x128xf32> -> vector<16x128xf32>
    %c3 = arith.constant 3 : index
    %c0_47 = arith.constant 0 : index
    %128 = vector.load %arg5[%c3, %c0_47] : memref<40x128xf32, #tpu.memory_space<vmem>>, vector<1x128xf32>
    %129 = vector.broadcast %128 : vector<1x128xf32> to vector<16x128xf32>
    %130 = arith.addf %127, %129 : vector<16x128xf32>
    %c0_48 = arith.constant 0 : index
    %c0_49 = arith.constant 0 : index
    %131 = vector.load %arg6[%c0_48, %c0_49] : memref<16x128xf32, #tpu.memory_space<vmem>>, vector<16x128xf32>
    tpu.vector_store %arg6[%c0_48, %c0_49], %130 {strides = array<i32>} : memref<16x128xf32, #tpu.memory_space<vmem>>, vector<16x128xf32>,
    return
  }
}

</mosaic_0001>

<llo_original>
// kernel: tpu_custom_call.1
$region0: #{tpu_custom_call.1}
  #allocation0 [shape = 'u32[]', space=smem, size = 0x4, offset = 0x4, fixed_abs, tag = 'smem constant byte address 0x4 - core index']
  #allocation1 [shape = 'u32[144,128]{1,0:T(1,128)}', space=vmem, size = 0x12000, scoped, tag = 'internal scratch']
  %s0 = inlined_call_operand.vmem [shape: f32[16,8], index: 0, kind: input, shape index: {}]
  %s1 = inlined_call_operand.vmem [shape: f32[8,16], index: 1, kind: input, shape index: {}]
  %s2 = inlined_call_operand.vmem [shape: f32[8,36], index: 2, kind: input, shape index: {}]
  %s3 = inlined_call_operand.vmem [shape: f32[4,8], index: 3, kind: input, shape index: {}]
  %s4 = inlined_call_operand.vmem [shape: s8[16,16], index: 4, kind: input, shape index: {}]
  %s5 = inlined_call_operand.hbm [shape: f32[40,128], index: 5, kind: input, shape index: {}]
  %s6 = inlined_call_operand.hbm [shape: f32[16,128], index: 6, kind: output, shape index: {}]
  %s7 = sld [smem:[#allocation0]]
  $region38: #{tpu_custom_call.1} parent=0
    _
  %s9 = ssub.s32 1, %s7
  %s10 = scalar_select 0, %s9, %s7
  $region1: #{tpu_custom_call.1} parent=0
    #allocation2 [shape = 'u8[20480]{0}', space=vmem, size = 0x5000, scoped, tag = 'input window, operand 5, single buffered']
    #allocation3 [shape = 's32[1]{0}', space=sflag, size = 0x4, scoped, tag = 'scoped memory for tpu_custom_call.1']
    #allocation4 [shape = 's32[1]{0}', space=sflag, size = 0x4, scoped, tag = 'scoped memory for tpu_custom_call.1']
    #allocation5 [shape = 'u8[8192]{0}', space=vmem, size = 0x2000, scoped, tag = 'output window, operand 0, single buffered']
    %11 = vsyncpa [#allocation3], 0
    %12 = vsyncpa [#allocation4], 0
    // Predicated region
    $region2: #{tpu_custom_call.1} parent=1 // pred_check
      _
    $region3: #{tpu_custom_call.1} parent=1 // pred_check_branch
      %14 = sbr.rel (0) target = $region5
    $region4: #{tpu_custom_call.1} parent=1 // pred_region
      _
    $region5: #{tpu_custom_call.1} parent=1 // pred_fallthru
      _
    // Predicated region
    $region6: #{tpu_custom_call.1} parent=1 // pred_check
      _
    $region7: #{tpu_custom_call.1} parent=1 // pred_check_branch
      %16 = sbr.rel (0) target = $region9
    $region8: #{tpu_custom_call.1} parent=1 // pred_region
      _
    $region9: #{tpu_custom_call.1} parent=1 // pred_fallthru
      _
    // Predicated region
    $region10: #{tpu_custom_call.1} parent=1 // pred_check
      _
    $region11: #{tpu_custom_call.1} parent=1 // pred_check_branch
      %18 = sbr.rel (0) target = $region13
    $region12: #{tpu_custom_call.1} parent=1 // pred_region
      _
    $region13: #{tpu_custom_call.1} parent=1 // pred_fallthru
      _
    // Predicated region
    $region14: #{tpu_custom_call.1} parent=1 // pred_check
      _
    $region15: #{tpu_custom_call.1} parent=1 // pred_check_branch
      %20 = sbr.rel (0) target = $region17
    $region16: #{tpu_custom_call.1} parent=1 // pred_region
      _
    $region17: #{tpu_custom_call.1} parent=1 // pred_fallthru
      _
    // Predicated region
    $region18: #{tpu_custom_call.1} parent=1 // pred_check
      _
    $region19: #{tpu_custom_call.1} parent=1 // pred_check_branch
      %22 = sbr.rel (0) target = $region21
    $region20: #{tpu_custom_call.1} parent=1 // pred_region
      _
    $region21: #{tpu_custom_call.1} parent=1 // pred_fallthru
      _
    // Predicated region
    $region22: #{tpu_custom_call.1} parent=1 // pred_check
      _
    $region23: #{tpu_custom_call.1} parent=1 // pred_check_branch
      %24 = sbr.rel (0) target = $region25
    $region24: #{tpu_custom_call.1} parent=1 // pred_region
      %s26 = ssub.s32 640, 640
      %27 = vsyncadd [#allocation3], %s26
      %s28 = sshll.u32 [#allocation2], 4
      %s29 = int_to_ptr.vmem [resolvable:$true] %s28
      %34 = dma.hbm_to_vmem [thread:$0]  %s5, 640, %s29, [#allocation3], 128, 128, 8
    $region25: #{tpu_custom_call.1} parent=1 // pred_fallthru
      _
    // Predicated region
    $region26: #{tpu_custom_call.1} parent=1 // pred_check
      _
    $region27: #{tpu_custom_call.1} parent=1 // pred_check_branch
      %36 = sbr.rel (0) target = $region29
    $region28: #{tpu_custom_call.1} parent=1 // pred_region
      %37 = dma.done [#allocation3], 640
    $region29: #{tpu_custom_call.1} parent=1 // pred_fallthru
      _
    %v38 = vld [vmem:[%s0] sm:$0xff]
    %v39 = vld [vmem:[%s0 + $0x8] sm:$0xff]
    %v40 = vld [vmem:[%s2] sm:$0xff]
    %vm41 = vcmask 64512
    %v43 = vsel %vm41, %v38, 0
    %v46 = vsel %vm41, %v39, 0
    %48 = vmatprep.subr.mxu0 0.0
    %49 = vmatpush1.msra.mxu0 0.0
    %50 = vmatprep.subr.mxu0 0.0
    %51 = vmatpush1.msra.mxu0 0.0
    %52 = vmatprep.subr.mxu0 0.0
    %53 = vmatpush1.msra.mxu0 0.0
    %54 = vmatprep.subr.mxu0 0.0
    %55 = vmatpush1.msra.mxu0 0.0
    %56 = vmatprep.subr.mxu0 0.0
    %57 = vmatpush1.msra.mxu0 0.0
    %58 = vmatprep.subr.mxu0 0.0
    %59 = vmatpush1.msra.mxu0 0.0
    %60 = vmatprep.subr.mxu0 0.0
    %61 = vmatpush1.msra.mxu0 0.0
    %62 = vmatprep.subr.mxu0 0.0
    %63 = vmatpush1.msra.mxu0 0.0
    %64 = vmatprep.subr.mxu0 0.0
    %65 = vmatpush1.msra.mxu0 0.0
    %66 = vmatprep.subr.mxu0 0.0
    %67 = vmatpush1.msra.mxu0 0.0
    %68 = vmatprep.subr.mxu0 0.0
    %69 = vmatpush1.msra.mxu0 0.0
    %70 = vmatprep.subr.mxu0 0.0
    %71 = vmatpush1.msra.mxu0 0.0
    %72 = vmatprep.subr.mxu0 0.0
    %73 = vmatpush1.msra.mxu0 0.0
    %74 = vmatprep.subr.mxu0 0.0
    %75 = vmatpush1.msra.mxu0 0.0
    %76 = vmatprep.subr.mxu0 0.0
    %77 = vmatpush1.msra.mxu0 0.0
    %78 = vmatprep.subr.mxu0 0.0
    %79 = vmatpush1.msra.mxu0 %v40
    %80 = vmatprep.subr.mxu0 0.0
    %81 = vmatpush2.msra.mxu0 0.0
    %82 = vmatprep.subr.mxu0 0.0
    %83 = vmatpush2.msra.mxu0 0.0
    %84 = vmatprep.subr.mxu0 0.0
    %85 = vmatpush2.msra.mxu0 0.0
    %86 = vmatprep.subr.mxu0 0.0
    %87 = vmatpush2.msra.mxu0 0.0
    %88 = vmatprep.subr.mxu0 0.0
    %89 = vmatpush2.msra.mxu0 0.0
    %90 = vmatprep.subr.mxu0 0.0
    %91 = vmatpush2.msra.mxu0 0.0
    %92 = vmatprep.subr.mxu0 0.0
    %93 = vmatpush2.msra.mxu0 0.0
    %94 = vmatprep.subr.mxu0 0.0
    %95 = vmatpush2.msra.mxu0 0.0
    %96 = vmatprep.subr.mxu0 0.0
    %97 = vmatpush2.msra.mxu0 0.0
    %98 = vmatprep.subr.mxu0 0.0
    %99 = vmatpush2.msra.mxu0 0.0
    %100 = vmatprep.subr.mxu0 0.0
    %101 = vmatpush2.msra.mxu0 0.0
    %102 = vmatprep.subr.mxu0 0.0
    %103 = vmatpush2.msra.mxu0 0.0
    %104 = vmatprep.subr.mxu0 0.0
    %105 = vmatpush2.msra.mxu0 0.0
    %106 = vmatprep.subr.mxu0 0.0
    %107 = vmatpush2.msra.mxu0 0.0
    %108 = vmatprep.subr.mxu0 0.0
    %109 = vmatpush2.msra.mxu0 0.0
    %110 = vmatprep.subr.mxu0 0.0
    %111 = vmatpush2.msra.mxu0 0.0
    %112 = vmatprep.mubr.f32.mxu0 0.0
    %113 = vmatmul.mubr.f32.gmra.mxu0 %v43
    %v114 = vpop.f32.mrf.mxu0
    %v115 = vadd.f32 0.0, %v114
    %v116 = vpop.f32.mrf.mxu0
    %117 = vmatprep.mubr.f32.mxu0 0.0
    %118 = vmatmul.mubr.f32.gmra.mxu0 %v46
    %v119 = vpop.f32.mrf.mxu0
    %v120 = vadd.f32 0.0, %v119
    %v121 = vpop.f32.mrf.mxu0
    %122 = vdwg.mxu0
    %v123 = vld [vmem:[%s3] sm:$0xf]
    %v124 = vld [vmem:[%s1] sm:$0xff]
    %v126 = vsel %vm41, %v123, 0
    %128 = vmatprep.subr.mxu0 0.0
    %129 = vmatpush1.msra.mxu0 0.0
    %130 = vmatprep.subr.mxu0 0.0
    %131 = vmatpush1.msra.mxu0 0.0
    %132 = vmatprep.subr.mxu0 0.0
    %133 = vmatpush1.msra.mxu0 0.0
    %134 = vmatprep.subr.mxu0 0.0
    %135 = vmatpush1.msra.mxu0 0.0
    %136 = vmatprep.subr.mxu0 0.0
    %137 = vmatpush1.msra.mxu0 0.0
    %138 = vmatprep.subr.mxu0 0.0
    %139 = vmatpush1.msra.mxu0 0.0
    %140 = vmatprep.subr.mxu0 0.0
    %141 = vmatpush1.msra.mxu0 0.0
    %142 = vmatprep.subr.mxu0 0.0
    %143 = vmatpush1.msra.mxu0 0.0
    %144 = vmatprep.subr.mxu0 0.0
    %145 = vmatpush1.msra.mxu0 0.0
    %146 = vmatprep.subr.mxu0 0.0
    %147 = vmatpush1.msra.mxu0 0.0
    %148 = vmatprep.subr.mxu0 0.0
    %149 = vmatpush1.msra.mxu0 0.0
    %150 = vmatprep.subr.mxu0 0.0
    %151 = vmatpush1.msra.mxu0 0.0
    %152 = vmatprep.subr.mxu0 0.0
    %153 = vmatpush1.msra.mxu0 0.0
    %154 = vmatprep.subr.mxu0 0.0
    %155 = vmatpush1.msra.mxu0 0.0
    %156 = vmatprep.subr.mxu0 0.0
    %157 = vmatpush1.msra.mxu0 0.0
    %158 = vmatprep.subr.mxu0 0.0
    %159 = vmatpush1.msra.mxu0 %v124
    %160 = vmatprep.subr.mxu0 0.0
    %161 = vmatpush2.msra.mxu0 0.0
    %162 = vmatprep.subr.mxu0 0.0
    %163 = vmatpush2.msra.mxu0 0.0
    %164 = vmatprep.subr.mxu0 0.0
    %165 = vmatpush2.msra.mxu0 0.0
    %166 = vmatprep.subr.mxu0 0.0
    %167 = vmatpush2.msra.mxu0 0.0
    %168 = vmatprep.subr.mxu0 0.0
    %169 = vmatpush2.msra.mxu0 0.0
    %170 = vmatprep.subr.mxu0 0.0
    %171 = vmatpush2.msra.mxu0 0.0
    %172 = vmatprep.subr.mxu0 0.0
    %173 = vmatpush2.msra.mxu0 0.0
    %174 = vmatprep.subr.mxu0 0.0
    %175 = vmatpush2.msra.mxu0 0.0
    %176 = vmatprep.subr.mxu0 0.0
    %177 = vmatpush2.msra.mxu0 0.0
    %178 = vmatprep.subr.mxu0 0.0
    %179 = vmatpush2.msra.mxu0 0.0
    %180 = vmatprep.subr.mxu0 0.0
    %181 = vmatpush2.msra.mxu0 0.0
    %182 = vmatprep.subr.mxu0 0.0
    %183 = vmatpush2.msra.mxu0 0.0
    %184 = vmatprep.subr.mxu0 0.0
    %185 = vmatpush2.msra.mxu0 0.0
    %186 = vmatprep.subr.mxu0 0.0
    %187 = vmatpush2.msra.mxu0 0.0
    %188 = vmatprep.subr.mxu0 0.0
    %189 = vmatpush2.msra.mxu0 0.0
    %190 = vmatprep.subr.mxu0 0.0
    %191 = vmatpush2.msra.mxu0 0.0
    %192 = vmatprep.mubr.f32.mxu0 0.0
    %193 = vmatmul.mubr.f32.gmra.mxu0 %v126
    %v194 = vpop.f32.mrf.mxu0
    %v195 = vadd.f32 0.0, %v194
    %v196 = vpop.f32.mrf.mxu0
    %197 = vdwg.mxu0
    %v198 = vlaneseq
    %v199 = vand.u32 %v198, 127
    %v200 = vlaneseq
    %v201 = vshrl.u32 %v200, 7
    %v202 = vmul.u32 %v201, 16
    %vm203 = vcmp.ge.s32.totalorder %v199, %v202
    %v204 = vadd.s32 %v202, 16
    %vm205 = vcmp.lt.s32.totalorder %v199, %v204
    %vm206 = vmand %vm203, %vm205
    %v207 = vsel %vm206, 1, 0
    %v208 = vcvt.s32.f32 %v207
    %v209 = vadd.s32 %v201, 8
    %v210 = vadd.s32 %v201, 16
    %v211 = vadd.s32 %v201, 24
    %v212 = vadd.s32 %v201, 32
    %v213 = vadd.s32 %v201, 40
    %v214 = vadd.s32 %v201, 48
    %v215 = vadd.s32 %v201, 56
    %v216 = vmul.u32 %v199, 16
    %vm217 = vcmp.ge.s32.totalorder %v201, %v216
    %vm218 = vcmp.ge.s32.totalorder %v209, %v216
    %vm219 = vcmp.ge.s32.totalorder %v210, %v216
    %vm220 = vcmp.ge.s32.totalorder %v211, %v216
    %vm221 = vcmp.ge.s32.totalorder %v212, %v216
    %vm222 = vcmp.ge.s32.totalorder %v213, %v216
    %vm223 = vcmp.ge.s32.totalorder %v214, %v216
    %vm224 = vcmp.ge.s32.totalorder %v215, %v216
    %v225 = vadd.s32 %v216, 16
    %vm226 = vcmp.lt.s32.totalorder %v201, %v225
    %vm227 = vcmp.lt.s32.totalorder %v209, %v225
    %vm228 = vcmp.lt.s32.totalorder %v210, %v225
    %vm229 = vcmp.lt.s32.totalorder %v211, %v225
    %vm230 = vcmp.lt.s32.totalorder %v212, %v225
    %vm231 = vcmp.lt.s32.totalorder %v213, %v225
    %vm232 = vcmp.lt.s32.totalorder %v214, %v225
    %vm233 = vcmp.lt.s32.totalorder %v215, %v225
    %vm234 = vmand %vm217, %vm226
    %vm235 = vmand %vm218, %vm227
    %vm236 = vmand %vm219, %vm228
    %vm237 = vmand %vm220, %vm229
    %vm238 = vmand %vm221, %vm230
    %vm239 = vmand %vm222, %vm231
    %vm240 = vmand %vm223, %vm232
    %vm241 = vmand %vm224, %vm233
    %v242 = vsel %vm234, 1, 0
    %v243 = vsel %vm235, 1, 0
    %v244 = vsel %vm236, 1, 0
    %v245 = vsel %vm237, 1, 0
    %v246 = vsel %vm238, 1, 0
    %v247 = vsel %vm239, 1, 0
    %v248 = vsel %vm240, 1, 0
    %v249 = vsel %vm241, 1, 0
    %v250 = vcvt.s32.f32 %v242
    %v251 = vcvt.s32.f32 %v243
    %v252 = vcvt.s32.f32 %v244
    %v253 = vcvt.s32.f32 %v245
    %v254 = vcvt.s32.f32 %v246
    %v255 = vcvt.s32.f32 %v247
    %v256 = vcvt.s32.f32 %v248
    %v257 = vcvt.s32.f32 %v249
    %259 = vrot.lane.b32.xlu0 %v195, 16
    %v260 = vpop.permute.xlu0 %259
    %262 = vrot.lane.b32.xlu0 %v195, 32
    %v263 = vpop.permute.xlu0 %262
    %265 = vrot.lane.b32.xlu0 %v195, 48
    %v266 = vpop.permute.xlu0 %265
    %vm268 = vcmask 130048
    %v269 = vsel %vm268, %v195, %v260
    %vm270 = vcmask 261120
    %v271 = vsel %vm270, %v269, %v263
    %vm272 = vcmask 392192
    %v273 = vsel %vm272, %v271, %v266
    %v274 = vmul.f32 %v273, %v208
    %vm275 = vcmask 519168
    %v276 = vsel %vm275, %v274, 0.0
    %v277 = vrot.slane %v276, 4
    %v278 = vadd.f32 %v276, %v277
    %v279 = vrot.slane %v278, 2
    %v280 = vadd.f32 %v278, %v279
    %v281 = vrot.slane %v280, 1
    %v282 = vadd.f32 %v280, %v281
    %285 = vrot.lane.b32.xlu0 %v115, 96
    %v286 = vpop.permute.xlu0 %285
    %287 = vrot.lane.b32.xlu0 %v120, 96
    %v288 = vpop.permute.xlu0 %287
    %vm289 = vcmask 31744
    %v290 = vsel %vm289, %v286, 0
    %v292 = vsel %vm289, %v288, 0
    %vm294 = vcmask 1043456
    %v296 = vsel %vm294, %v208, 0
    %298 = vmatprep.subr.mxu0 0.0
    %299 = vmatpush1.msra.mxu0 0.0
    %300 = vmatprep.subr.mxu0 0.0
    %301 = vmatpush1.msra.mxu0 0.0
    %302 = vmatprep.subr.mxu0 0.0
    %303 = vmatpush1.msra.mxu0 0.0
    %304 = vmatprep.subr.mxu0 0.0
    %305 = vmatpush1.msra.mxu0 0.0
    %306 = vmatprep.subr.mxu0 0.0
    %307 = vmatpush1.msra.mxu0 0.0
    %308 = vmatprep.subr.mxu0 0.0
    %309 = vmatpush1.msra.mxu0 0.0
    %310 = vmatprep.subr.mxu0 0.0
    %311 = vmatpush1.msra.mxu0 0.0
    %312 = vmatprep.subr.mxu0 0.0
    %313 = vmatpush1.msra.mxu0 0.0
    %314 = vmatprep.subr.mxu0 0.0
    %315 = vmatpush1.msra.mxu0 0.0
    %316 = vmatprep.subr.mxu0 0.0
    %317 = vmatpush1.msra.mxu0 0.0
    %318 = vmatprep.subr.mxu0 0.0
    %319 = vmatpush1.msra.mxu0 0.0
    %320 = vmatprep.subr.mxu0 0.0
    %321 = vmatpush1.msra.mxu0 0.0
    %322 = vmatprep.subr.mxu0 0.0
    %323 = vmatpush1.msra.mxu0 0.0
    %324 = vmatprep.subr.mxu0 0.0
    %325 = vmatpush1.msra.mxu0 0.0
    %326 = vmatprep.subr.mxu0 0.0
    %327 = vmatpush1.msra.mxu0 0.0
    %328 = vmatprep.subr.mxu0 0.0
    %329 = vmatpush1.msra.mxu0 %v296
    %330 = vmatprep.subr.mxu0 0.0
    %331 = vmatpush2.msra.mxu0 0.0
    %332 = vmatprep.subr.mxu0 0.0
    %333 = vmatpush2.msra.mxu0 0.0
    %334 = vmatprep.subr.mxu0 0.0
    %335 = vmatpush2.msra.mxu0 0.0
    %336 = vmatprep.subr.mxu0 0.0
    %337 = vmatpush2.msra.mxu0 0.0
    %338 = vmatprep.subr.mxu0 0.0
    %339 = vmatpush2.msra.mxu0 0.0
    %340 = vmatprep.subr.mxu0 0.0
    %341 = vmatpush2.msra.mxu0 0.0
    %342 = vmatprep.subr.mxu0 0.0
    %343 = vmatpush2.msra.mxu0 0.0
    %344 = vmatprep.subr.mxu0 0.0
    %345 = vmatpush2.msra.mxu0 0.0
    %346 = vmatprep.subr.mxu0 0.0
    %347 = vmatpush2.msra.mxu0 0.0
    %348 = vmatprep.subr.mxu0 0.0
    %349 = vmatpush2.msra.mxu0 0.0
    %350 = vmatprep.subr.mxu0 0.0
    %351 = vmatpush2.msra.mxu0 0.0
    %352 = vmatprep.subr.mxu0 0.0
    %353 = vmatpush2.msra.mxu0 0.0
    %354 = vmatprep.subr.mxu0 0.0
    %355 = vmatpush2.msra.mxu0 0.0
    %356 = vmatprep.subr.mxu0 0.0
    %357 = vmatpush2.msra.mxu0 0.0
    %358 = vmatprep.subr.mxu0 0.0
    %359 = vmatpush2.msra.mxu0 0.0
    %360 = vmatprep.subr.mxu0 0.0
    %361 = vmatpush2.msra.mxu0 0.0
    %362 = vmatprep.mubr.f32.mxu0 0.0
    %363 = vmatmul.mubr.f32.gmra.mxu0 %v290
    %v364 = vpop.f32.mrf.mxu0
    %v365 = vadd.f32 %v282, %v364
    %v366 = vpop.f32.mrf.mxu0
    %367 = vmatprep.mubr.f32.mxu0 0.0
    %368 = vmatmul.mubr.f32.gmra.mxu0 %v292
    %v369 = vpop.f32.mrf.mxu0
    %v370 = vadd.f32 %v282, %v369
    %v371 = vpop.f32.mrf.mxu0
    %372 = vdwg.mxu0
    %v373 = vmul.f32 %v365, 0.2
    %v374 = vmul.f32 %v370, 0.2
    %v375 = vmax.f32 %v365, %v373
    %v376 = vmax.f32 %v370, %v374
    %v377 = vld [vmem:[%s4] sm:$0x3]
    %v378 = vld [vmem:[%s4 + $0x2] sm:$0x3]
    %v379 = vunpack.c.0.s8 %v377
    %v380 = vunpack.c.0.s8 %v378
    %v381 = vcvt.s32.f32 %v379
    %v382 = vcvt.s32.f32 %v380
    %385 = vrot.lane.b32.xlu0 %v381, 16
    %v386 = vpop.permute.xlu0 %385
    %387 = vrot.lane.b32.xlu0 %v382, 16
    %v388 = vpop.permute.xlu0 %387
    %391 = vrot.lane.b32.xlu0 %v381, 32
    %v392 = vpop.permute.xlu0 %391
    %393 = vrot.lane.b32.xlu0 %v382, 32
    %v394 = vpop.permute.xlu0 %393
    %397 = vrot.lane.b32.xlu0 %v381, 48
    %v398 = vpop.permute.xlu0 %397
    %399 = vrot.lane.b32.xlu0 %v382, 48
    %v400 = vpop.permute.xlu0 %399
    %v403 = vsel %vm268, %v381, %v386
    %v404 = vsel %vm268, %v382, %v388
    %v405 = vsel %vm270, %v403, %v392
    %v406 = vsel %vm270, %v404, %v394
    %v407 = vsel %vm272, %v405, %v398
    %v408 = vsel %vm272, %v406, %v400
    %vm409 = vcmp.gt.f32.partialorder %v407, 0.0
    %vm410 = vcmp.gt.f32.partialorder %v408, 0.0
    %v411 = vsel %vm409, %v375, -1e+30
    %v412 = vsel %vm410, %v376, -1e+30
    %vm413 = vcmask 523264
    %v414 = vsel %vm413, %v411, -inf
    %415 = vmax.xlane.f32.xlu0 %v414
    %v416 = vpop.xlane.xlu0 %415
    %v417 = vsel %vm413, %v412, -inf
    %418 = vmax.xlane.f32.xlu0 %v417
    %v419 = vpop.xlane.xlu0 %418
    %v420 = vsub.f32 %v411, %v416
    %v421 = vsub.f32 %v412, %v419
    %v422 = vmul.f32 %v420, 1.442695
    %v423 = vpow.pop %v422
    %v424 = vmul.f32 %v421, 1.442695
    %v425 = vpow.pop %v424
    %v427 = vsel %vm413, %v423, 0
    %v430 = vsel %vm413, %v425, 0
    %432 = vmatprep.subr.mxu0 0.0
    %433 = vmatpush1.msra.mxu0 0.0
    %434 = vmatprep.subr.mxu0 0.0
    %435 = vmatpush1.msra.mxu0 0.0
    %436 = vmatprep.subr.mxu0 0.0
    %437 = vmatpush1.msra.mxu0 0.0
    %438 = vmatprep.subr.mxu0 0.0
    %439 = vmatpush1.msra.mxu0 0.0
    %440 = vmatprep.subr.mxu0 0.0
    %441 = vmatpush1.msra.mxu0 0.0
    %442 = vmatprep.subr.mxu0 0.0
    %443 = vmatpush1.msra.mxu0 0.0
    %444 = vmatprep.subr.mxu0 0.0
    %445 = vmatpush1.msra.mxu0 0.0
    %446 = vmatprep.subr.mxu0 0.0
    %447 = vmatpush1.msra.mxu0 0.0
    %448 = vmatprep.subr.mxu0 0.0
    %449 = vmatpush1.msra.mxu0 %v257
    %450 = vmatprep.subr.mxu0 0.0
    %451 = vmatpush1.msra.mxu0 %v256
    %452 = vmatprep.subr.mxu0 0.0
    %453 = vmatpush1.msra.mxu0 %v255
    %454 = vmatprep.subr.mxu0 0.0
    %455 = vmatpush1.msra.mxu0 %v254
    %456 = vmatprep.subr.mxu0 0.0
    %457 = vmatpush1.msra.mxu0 %v253
    %458 = vmatprep.subr.mxu0 0.0
    %459 = vmatpush1.msra.mxu0 %v252
    %460 = vmatprep.subr.mxu0 0.0
    %461 = vmatpush1.msra.mxu0 %v251
    %462 = vmatprep.subr.mxu0 0.0
    %463 = vmatpush1.msra.mxu0 %v250
    %464 = vmatprep.subr.mxu0 0.0
    %465 = vmatpush2.msra.mxu0 0.0
    %466 = vmatprep.subr.mxu0 0.0
    %467 = vmatpush2.msra.mxu0 0.0
    %468 = vmatprep.subr.mxu0 0.0
    %469 = vmatpush2.msra.mxu0 0.0
    %470 = vmatprep.subr.mxu0 0.0
    %471 = vmatpush2.msra.mxu0 0.0
    %472 = vmatprep.subr.mxu0 0.0
    %473 = vmatpush2.msra.mxu0 0.0
    %474 = vmatprep.subr.mxu0 0.0
    %475 = vmatpush2.msra.mxu0 0.0
    %476 = vmatprep.subr.mxu0 0.0
    %477 = vmatpush2.msra.mxu0 0.0
    %478 = vmatprep.subr.mxu0 0.0
    %479 = vmatpush2.msra.mxu0 0.0
    %480 = vmatprep.subr.mxu0 0.0
    %481 = vmatpush2.msra.mxu0 0.0
    %482 = vmatprep.subr.mxu0 0.0
    %483 = vmatpush2.msra.mxu0 0.0
    %484 = vmatprep.subr.mxu0 0.0
    %485 = vmatpush2.msra.mxu0 0.0
    %486 = vmatprep.subr.mxu0 0.0
    %487 = vmatpush2.msra.mxu0 0.0
    %488 = vmatprep.subr.mxu0 0.0
    %489 = vmatpush2.msra.mxu0 0.0
    %490 = vmatprep.subr.mxu0 0.0
    %491 = vmatpush2.msra.mxu0 0.0
    %492 = vmatprep.subr.mxu0 0.0
    %493 = vmatpush2.msra.mxu0 0.0
    %494 = vmatprep.subr.mxu0 0.0
    %495 = vmatpush2.msra.mxu0 0.0
    %496 = vmatprep.mubr.f32.mxu0 0.0
    %497 = vmatmul.mubr.f32.gmra.mxu0 %v427
    %v498 = vpop.f32.mrf.mxu0
    %v499 = vadd.f32 1e-30, %v498
    %v500 = vpop.f32.mrf.mxu0
    %501 = vmatprep.mubr.f32.mxu0 0.0
    %502 = vmatmul.mubr.f32.gmra.mxu0 %v430
    %v503 = vpop.f32.mrf.mxu0
    %v504 = vadd.f32 1e-30, %v503
    %v505 = vpop.f32.mrf.mxu0
    %506 = vdwg.mxu0
    %v507 = vrcp.pop %v499
    %v508 = vrcp.pop %v504
    %v510 = vsel %vm289, %v507, 0
    %v513 = vsel %vm289, %v508, 0
    %515 = vmatprep.subr.mxu0 0.0
    %516 = vmatpush1.msra.mxu0 0.0
    %517 = vmatprep.subr.mxu0 0.0
    %518 = vmatpush1.msra.mxu0 0.0
    %519 = vmatprep.subr.mxu0 0.0
    %520 = vmatpush1.msra.mxu0 0.0
    %521 = vmatprep.subr.mxu0 0.0
    %522 = vmatpush1.msra.mxu0 0.0
    %523 = vmatprep.subr.mxu0 0.0
    %524 = vmatpush1.msra.mxu0 0.0
    %525 = vmatprep.subr.mxu0 0.0
    %526 = vmatpush1.msra.mxu0 0.0
    %527 = vmatprep.subr.mxu0 0.0
    %528 = vmatpush1.msra.mxu0 0.0
    %529 = vmatprep.subr.mxu0 0.0
    %530 = vmatpush1.msra.mxu0 0.0
    %531 = vmatprep.subr.mxu0 0.0
    %532 = vmatpush1.msra.mxu0 0.0
    %533 = vmatprep.subr.mxu0 0.0
    %534 = vmatpush1.msra.mxu0 0.0
    %535 = vmatprep.subr.mxu0 0.0
    %536 = vmatpush1.msra.mxu0 0.0
    %537 = vmatprep.subr.mxu0 0.0
    %538 = vmatpush1.msra.mxu0 0.0
    %539 = vmatprep.subr.mxu0 0.0
    %540 = vmatpush1.msra.mxu0 0.0
    %541 = vmatprep.subr.mxu0 0.0
    %542 = vmatpush1.msra.mxu0 0.0
    %543 = vmatprep.subr.mxu0 0.0
    %544 = vmatpush1.msra.mxu0 0.0
    %545 = vmatprep.subr.mxu0 0.0
    %546 = vmatpush1.msra.mxu0 %v296
    %547 = vmatprep.subr.mxu0 0.0
    %548 = vmatpush2.msra.mxu0 0.0
    %549 = vmatprep.subr.mxu0 0.0
    %550 = vmatpush2.msra.mxu0 0.0
    %551 = vmatprep.subr.mxu0 0.0
    %552 = vmatpush2.msra.mxu0 0.0
    %553 = vmatprep.subr.mxu0 0.0
    %554 = vmatpush2.msra.mxu0 0.0
    %555 = vmatprep.subr.mxu0 0.0
    %556 = vmatpush2.msra.mxu0 0.0
    %557 = vmatprep.subr.mxu0 0.0
    %558 = vmatpush2.msra.mxu0 0.0
    %559 = vmatprep.subr.mxu0 0.0
    %560 = vmatpush2.msra.mxu0 0.0
    %561 = vmatprep.subr.mxu0 0.0
    %562 = vmatpush2.msra.mxu0 0.0
    %563 = vmatprep.subr.mxu0 0.0
    %564 = vmatpush2.msra.mxu0 0.0
    %565 = vmatprep.subr.mxu0 0.0
    %566 = vmatpush2.msra.mxu0 0.0
    %567 = vmatprep.subr.mxu0 0.0
    %568 = vmatpush2.msra.mxu0 0.0
    %569 = vmatprep.subr.mxu0 0.0
    %570 = vmatpush2.msra.mxu0 0.0
    %571 = vmatprep.subr.mxu0 0.0
    %572 = vmatpush2.msra.mxu0 0.0
    %573 = vmatprep.subr.mxu0 0.0
    %574 = vmatpush2.msra.mxu0 0.0
    %575 = vmatprep.subr.mxu0 0.0
    %576 = vmatpush2.msra.mxu0 0.0
    %577 = vmatprep.subr.mxu0 0.0
    %578 = vmatpush2.msra.mxu0 0.0
    %579 = vmatprep.mubr.f32.mxu0 0.0
    %580 = vmatmul.mubr.f32.gmra.mxu0 %v510
    %v581 = vpop.f32.mrf.mxu0
    %v582 = vadd.f32 0.0, %v581
    %v583 = vpop.f32.mrf.mxu0
    %584 = vmatprep.mubr.f32.mxu0 0.0
    %585 = vmatmul.mubr.f32.gmra.mxu0 %v513
    %v586 = vpop.f32.mrf.mxu0
    %v587 = vadd.f32 0.0, %v586
    %v588 = vpop.f32.mrf.mxu0
    %589 = vdwg.mxu0
    %v590 = vmul.f32 %v423, %v582
    %v591 = vmul.f32 %v425, %v587
    %vm592 = vcmp.ge.s32.totalorder %v199, 0
    %vm593 = vcmp.lt.s32.totalorder %v199, 8
    %vm594 = vmand %vm592, %vm593
    %v595 = vsel %vm594, %v115, 0.0
    %v596 = vsel %vm594, %v120, 0.0
    %vm597 = vcmp.ge.s32.totalorder %v199, 8
    %vm598 = vcmp.lt.s32.totalorder %v199, 16
    %vm599 = vmand %vm597, %vm598
    %v600 = vsel %vm599, %v115, 0.0
    %v601 = vsel %vm599, %v120, 0.0
    %vm602 = vcmp.ge.s32.totalorder %v199, 16
    %vm603 = vcmp.lt.s32.totalorder %v199, 24
    %vm604 = vmand %vm602, %vm603
    %v605 = vsel %vm604, %v115, 0.0
    %v606 = vsel %vm604, %v120, 0.0
    %vm607 = vcmp.ge.s32.totalorder %v199, 24
    %vm608 = vcmp.lt.s32.totalorder %v199, 32
    %vm609 = vmand %vm607, %vm608
    %v610 = vsel %vm609, %v115, 0.0
    %v611 = vsel %vm609, %v120, 0.0
    %v612 = vld [vmem:[#allocation2] sm:$0x1]
    %v613 = vlaneseq
    %v614 = vshrl.u32 %v613, 7
    %v615 = vsub.s32 0, %v614
    %v616 = vrot.slane %v612, %v615
    %v618 = vsel %vm413, %v590, 0
    %v621 = vsel %vm413, %v591, 0
    %623 = vmatprep.subr.mxu0 0.0
    %624 = vmatpush1.msra.mxu0 0.0
    %625 = vmatprep.subr.mxu0 0.0
    %626 = vmatpush1.msra.mxu0 0.0
    %627 = vmatprep.subr.mxu0 0.0
    %628 = vmatpush1.msra.mxu0 0.0
    %629 = vmatprep.subr.mxu0 0.0
    %630 = vmatpush1.msra.mxu0 0.0
    %631 = vmatprep.subr.mxu0 0.0
    %632 = vmatpush1.msra.mxu0 0.0
    %633 = vmatprep.subr.mxu0 0.0
    %634 = vmatpush1.msra.mxu0 0.0
    %635 = vmatprep.subr.mxu0 0.0
    %636 = vmatpush1.msra.mxu0 0.0
    %637 = vmatprep.subr.mxu0 0.0
    %638 = vmatpush1.msra.mxu0 0.0
    %639 = vmatprep.subr.mxu0 0.0
    %640 = vmatpush1.msra.mxu0 %v611
    %641 = vmatprep.subr.mxu0 0.0
    %642 = vmatpush1.msra.mxu0 %v610
    %643 = vmatprep.subr.mxu0 0.0
    %644 = vmatpush1.msra.mxu0 %v606
    %645 = vmatprep.subr.mxu0 0.0
    %646 = vmatpush1.msra.mxu0 %v605
    %647 = vmatprep.subr.mxu0 0.0
    %648 = vmatpush1.msra.mxu0 %v601
    %649 = vmatprep.subr.mxu0 0.0
    %650 = vmatpush1.msra.mxu0 %v600
    %651 = vmatprep.subr.mxu0 0.0
    %652 = vmatpush1.msra.mxu0 %v596
    %653 = vmatprep.subr.mxu0 0.0
    %654 = vmatpush1.msra.mxu0 %v595
    %655 = vmatprep.subr.mxu0 0.0
    %656 = vmatpush2.msra.mxu0 0.0
    %657 = vmatprep.subr.mxu0 0.0
    %658 = vmatpush2.msra.mxu0 0.0
    %659 = vmatprep.subr.mxu0 0.0
    %660 = vmatpush2.msra.mxu0 0.0
    %661 = vmatprep.subr.mxu0 0.0
    %662 = vmatpush2.msra.mxu0 0.0
    %663 = vmatprep.subr.mxu0 0.0
    %664 = vmatpush2.msra.mxu0 0.0
    %665 = vmatprep.subr.mxu0 0.0
    %666 = vmatpush2.msra.mxu0 0.0
    %667 = vmatprep.subr.mxu0 0.0
    %668 = vmatpush2.msra.mxu0 0.0
    %669 = vmatprep.subr.mxu0 0.0
    %670 = vmatpush2.msra.mxu0 0.0
    %671 = vmatprep.subr.mxu0 0.0
    %672 = vmatpush2.msra.mxu0 0.0
    %673 = vmatprep.subr.mxu0 0.0
    %674 = vmatpush2.msra.mxu0 0.0
    %675 = vmatprep.subr.mxu0 0.0
    %676 = vmatpush2.msra.mxu0 0.0
    %677 = vmatprep.subr.mxu0 0.0
    %678 = vmatpush2.msra.mxu0 0.0
    %679 = vmatprep.subr.mxu0 0.0
    %680 = vmatpush2.msra.mxu0 0.0
    %681 = vmatprep.subr.mxu0 0.0
    %682 = vmatpush2.msra.mxu0 0.0
    %683 = vmatprep.subr.mxu0 0.0
    %684 = vmatpush2.msra.mxu0 0.0
    %685 = vmatprep.subr.mxu0 0.0
    %686 = vmatpush2.msra.mxu0 0.0
    %687 = vmatprep.mubr.f32.mxu0 0.0
    %688 = vmatmul.mubr.f32.gmra.mxu0 %v618
    %v689 = vpop.f32.mrf.mxu0
    %v690 = vadd.f32 %v616, %v689
    %v691 = vpop.f32.mrf.mxu0
    %692 = vmatprep.mubr.f32.mxu0 0.0
    %693 = vmatmul.mubr.f32.gmra.mxu0 %v621
    %v694 = vpop.f32.mrf.mxu0
    %v695 = vadd.f32 %v616, %v694
    %v696 = vpop.f32.mrf.mxu0
    %697 = vdwg.mxu0
    %v698 = vsel %vm270, %v690, 0.0
    %v699 = vsel %vm270, %v695, 0.0
    %v700 = vadd.f32 %v698, %v699
    %v701 = vrot.slane %v700, 4
    %v702 = vadd.f32 %v700, %v701
    %v703 = vrot.slane %v702, 2
    %v704 = vadd.f32 %v702, %v703
    %v705 = vrot.slane %v704, 1
    %v706 = vadd.f32 %v704, %v705
    %v707 = vrcp.pop 16.0
    %v708 = vmul.f32 %v706, %v707
    %v709 = vsub.f32 %v690, %v708
    %v710 = vsub.f32 %v695, %v708
    %v711 = vmul.f32 %v709, %v709
    %v712 = vmul.f32 %v710, %v710
    %v713 = vsel %vm270, %v711, 0.0
    %v714 = vsel %vm270, %v712, 0.0
    %v715 = vadd.f32 %v713, %v714
    %v716 = vrot.slane %v715, 4
    %v717 = vadd.f32 %v715, %v716
    %v718 = vrot.slane %v717, 2
    %v719 = vadd.f32 %v717, %v718
    %v720 = vrot.slane %v719, 1
    %v721 = vadd.f32 %v719, %v720
    %v722 = vmul.f32 %v721, %v707
    %v723 = vld [vmem:[#allocation2 + $0x1] sm:$0x1]
    %v724 = vlaneseq
    %v725 = vshrl.u32 %v724, 7
    %v726 = vsub.s32 0, %v725
    %v727 = vrot.slane %v723, %v726
    %v728 = vmul.f32 %v727, %v709
    %v729 = vmul.f32 %v727, %v710
    %v730 = vadd.f32 %v722, 1e-05
    %v731 = vrsqrt.pop %v730
    %v732 = vmul.f32 %v728, %v731
    %v733 = vmul.f32 %v729, %v731
    %v734 = vld [vmem:[#allocation2 + $0x2] sm:$0x1]
    %v735 = vlaneseq
    %v736 = vshrl.u32 %v735, 7
    %v737 = vsub.s32 0, %v736
    %v738 = vrot.slane %v734, %v737
    %v739 = vadd.f32 %v732, %v738
    %v740 = vadd.f32 %v733, %v738
    %vm741 = vcmp.gt.f32.partialorder %v739, 0.0
    %vm742 = vcmp.gt.f32.partialorder %v740, 0.0
    %v743 = vmin.f32 %v739, 0.0
    %v744 = vmin.f32 %v740, 0.0
    %v745 = vmul.f32 %v743, 1.442695
    %v746 = vpow.pop %v745
    %v747 = vmul.f32 %v744, 1.442695
    %v748 = vpow.pop %v747
    %v749 = vsub.f32 %v746, 1.0
    %v750 = vsub.f32 %v748, 1.0
    %v751 = vsel %vm741, %v739, %v749
    %v752 = vsel %vm742, %v740, %v750
    %v753 = vld [vmem:[#allocation2 + $0x8] sm:$0xff]
    %v754 = vld [vmem:[#allocation2 + $0x10] sm:$0xff]
    %v755 = vld [vmem:[#allocation2 + $0x18] sm:$0xff]
    %v756 = vld [vmem:[#allocation2 + $0x20] sm:$0xff]
    %v757 = vld [vmem:[#allocation2 + $0x3] sm:$0x1]
    %v758 = vlaneseq
    %v759 = vshrl.u32 %v758, 7
    %v760 = vsub.s32 0, %v759
    %v761 = vrot.slane %v757, %v760
    %v763 = vsel %vm270, %v751, 0
    %v766 = vsel %vm270, %v752, 0
    %768 = vmatprep.subr.mxu0 0.0
    %769 = vmatpush1.msra.mxu0 0.0
    %770 = vmatprep.subr.mxu0 0.0
    %771 = vmatpush1.msra.mxu0 0.0
    %772 = vmatprep.subr.mxu0 0.0
    %773 = vmatpush1.msra.mxu0 0.0
    %774 = vmatprep.subr.mxu0 0.0
    %775 = vmatpush1.msra.mxu0 0.0
    %776 = vmatprep.subr.mxu0 0.0
    %777 = vmatpush1.msra.mxu0 0.0
    %778 = vmatprep.subr.mxu0 0.0
    %779 = vmatpush1.msra.mxu0 0.0
    %780 = vmatprep.subr.mxu0 0.0
    %781 = vmatpush1.msra.mxu0 0.0
    %782 = vmatprep.subr.mxu0 0.0
    %783 = vmatpush1.msra.mxu0 0.0
    %784 = vmatprep.subr.mxu0 0.0
    %785 = vmatpush1.msra.mxu0 0.0
    %786 = vmatprep.subr.mxu0 0.0
    %787 = vmatpush1.msra.mxu0 0.0
    %788 = vmatprep.subr.mxu0 0.0
    %789 = vmatpush1.msra.mxu0 0.0
    %790 = vmatprep.subr.mxu0 0.0
    %791 = vmatpush1.msra.mxu0 0.0
    %792 = vmatprep.subr.mxu0 0.0
    %793 = vmatpush1.msra.mxu0 %v756
    %794 = vmatprep.subr.mxu0 0.0
    %795 = vmatpush1.msra.mxu0 %v755
    %796 = vmatprep.subr.mxu0 0.0
    %797 = vmatpush1.msra.mxu0 %v754
    %798 = vmatprep.subr.mxu0 0.0
    %799 = vmatpush1.msra.mxu0 %v753
    %800 = vmatprep.subr.mxu0 0.0
    %801 = vmatpush2.msra.mxu0 0.0
    %802 = vmatprep.subr.mxu0 0.0
    %803 = vmatpush2.msra.mxu0 0.0
    %804 = vmatprep.subr.mxu0 0.0
    %805 = vmatpush2.msra.mxu0 0.0
    %806 = vmatprep.subr.mxu0 0.0
    %807 = vmatpush2.msra.mxu0 0.0
    %808 = vmatprep.subr.mxu0 0.0
    %809 = vmatpush2.msra.mxu0 0.0
    %810 = vmatprep.subr.mxu0 0.0
    %811 = vmatpush2.msra.mxu0 0.0
    %812 = vmatprep.subr.mxu0 0.0
    %813 = vmatpush2.msra.mxu0 0.0
    %814 = vmatprep.subr.mxu0 0.0
    %815 = vmatpush2.msra.mxu0 0.0
    %816 = vmatprep.subr.mxu0 0.0
    %817 = vmatpush2.msra.mxu0 0.0
    %818 = vmatprep.subr.mxu0 0.0
    %819 = vmatpush2.msra.mxu0 0.0
    %820 = vmatprep.subr.mxu0 0.0
    %821 = vmatpush2.msra.mxu0 0.0
    %822 = vmatprep.subr.mxu0 0.0
    %823 = vmatpush2.msra.mxu0 0.0
    %824 = vmatprep.subr.mxu0 0.0
    %825 = vmatpush2.msra.mxu0 0.0
    %826 = vmatprep.subr.mxu0 0.0
    %827 = vmatpush2.msra.mxu0 0.0
    %828 = vmatprep.subr.mxu0 0.0
    %829 = vmatpush2.msra.mxu0 0.0
    %830 = vmatprep.subr.mxu0 0.0
    %831 = vmatpush2.msra.mxu0 0.0
    %832 = vmatprep.mubr.f32.mxu0 0.0
    %833 = vmatmul.mubr.f32.gmra.mxu0 %v763
    %v834 = vpop.f32.mrf.mxu0
    %v835 = vadd.f32 %v761, %v834
    %v836 = vpop.f32.mrf.mxu0
    %837 = vmatprep.mubr.f32.mxu0 0.0
    %838 = vmatmul.mubr.f32.gmra.mxu0 %v766
    %v839 = vpop.f32.mrf.mxu0
    %v840 = vadd.f32 %v761, %v839
    %v841 = vpop.f32.mrf.mxu0
    %842 = vdwg.mxu0
    %843 = vst [vmem:[#allocation5] sm:$0xff] %v835
    %844 = vst [vmem:[#allocation5 + $0x8] sm:$0xff] %v840
    // Predicated region
    $region30: #{tpu_custom_call.1} parent=1 // pred_check
      _
    $region31: #{tpu_custom_call.1} parent=1 // pred_check_branch
      %846 = sbr.rel (0) target = $region33
    $region32: #{tpu_custom_call.1} parent=1 // pred_region
      %s848 = ssub.s32 256, 256
      %849 = vsyncadd [#allocation4], %s848
      %s850 = sshll.u32 [#allocation5], 4
      %s851 = int_to_ptr.vmem [resolvable:$true] %s850
      %856 = dma.vmem_to_hbm [thread:$0]  %s851, 256, %s6, [#allocation4], 128, 128, 8
    $region33: #{tpu_custom_call.1} parent=1 // pred_fallthru
      _
    // Predicated region
    $region34: #{tpu_custom_call.1} parent=1 // pred_check
      _
    $region35: #{tpu_custom_call.1} parent=1 // pred_check_branch
      %858 = sbr.rel (0) target = $region37
    $region36: #{tpu_custom_call.1} parent=1 // pred_region
      %859 = dma.done [#allocation4], 256
    $region37: #{tpu_custom_call.1} parent=1 // pred_fallthru
      _
    %860 = vsyncpa [#allocation3], 1
    %861 = vsyncpa [#allocation4], 1

</llo_original>
